<compile_context>
chip_gen: v7x
topology: tpu7x:2x2x1
jax: 0.10.0
libtpu: 0.0.40
codegen_flags: <defaults>
</compile_context>

<pallas_src>
import numpy as np
import jax
import jax.numpy as jnp
from jax import lax
from jax.experimental import pallas as pl
from jax.experimental.pallas import tpu as pltpu

# ----- scaled-down, synthetic hyper-parameters of Alpha -----
BS = 2            # batch size
SEQ_DE = 16       # source (German) sequence length
SEQ_EN = 8        # target (English) sequence length (incl. <sos>)
T = SEQ_EN - 1    # prediction steps (y = x_en[:, 1:])
BT = BS * T       # collapsed (batch, step) axis
V_DE = 50         # len(DE.vocab)
V_EN = 40         # len(EN.vocab)
V_PAD = 128       # lane-dense padded vocab width
E = 32            # embedding_features (conv in-channels)
F1 = 16           # n_featmaps1
F2 = 8            # n_featmaps2
FC = F1 + F2
L = 32            # linear_size
M = 3             # member_count
PAD = 1
SOS = 2
NEG_FILL = -1e4   # large-negative fill for padded vocab lanes

# packed gating-parameter buffer layout (rows x 5*E lanes, f32, 8-aligned rows)
R_WCONV = 0       # (FC, 5*E)   transposed fused im2col conv weight
R_BCONV = 24      # (1, FC)
R_WH = 32         # (FC, L)
R_BH = 56         # (1, L)
R_WO = 64         # (L, M)
R_BO = 96         # (1, M)
GP_ROWS = 104


# ------------------------------------------------------------ fused kernel ---
def alpha_fused_kernel(xde_ref, y_ref, emb_ref, gp_ref, stack_ref,
                       pred_ref, loss_ref, xp_s):
    f32 = jnp.float32

    # ---------------- embedding gather (fused, one-hot MXU matmul) ----------
    idx = xde_ref[...]                                          # (BS*SEQ, 1) i32
    iota_v = lax.broadcasted_iota(jnp.int32, (BS * SEQ_DE, V_DE), 1)
    onehot_de = (iota_v == idx).astype(f32)                     # (32, 50)
    embs = jnp.dot(onehot_de, emb_ref[...],
                   preferred_element_type=f32)                  # (BS*SEQ, E)

    # conv zero padding (padding=2) built in a small VMEM scratch
    xp_s[...] = jnp.zeros((BS, SEQ_DE + 4, E), f32)
    for b in range(BS):                                         # BS=2, static
        xp_s[b, 2:2 + SEQ_DE, :] = embs[b * SEQ_DE:(b + 1) * SEQ_DE, :]

    # ---------------- gating CNN (Alpha.get_alpha) --------------------------
    # im2col over the 5-tap window (conv5 padding=2; conv3 lives in taps 1..3)
    cols = [xp_s[:, k:k + SEQ_DE, :] for k in range(5)]         # 5 x (BS,SEQ,E)
    lhs = jnp.concatenate(cols, axis=-1).reshape(BS * SEQ_DE, 5 * E)  # (32,160)

    w_conv_t = gp_ref[R_WCONV:R_WCONV + FC, :]                  # (FC, 5E) lane-dense
    b_conv = gp_ref[R_BCONV:R_BCONV + 1, :FC]                   # (1, FC)
    feat = lax.dot_general(lhs, w_conv_t, (((1,), (1,)), ((), ())),
                           preferred_element_type=f32) + b_conv  # (BS*SEQ, FC)
    pooled = jnp.max(feat.reshape(BS, SEQ_DE, FC), axis=1)      # AdaptiveMaxPool1d(1)

    w_h = gp_ref[R_WH:R_WH + FC, :L]
    b_h = gp_ref[R_BH:R_BH + 1, :L]
    h = jnp.dot(pooled, w_h, preferred_element_type=f32) + b_h  # (BS, L)
    # dropout: inference-mode identity
    w_o = gp_ref[R_WO:R_WO + L, :M]
    b_o = gp_ref[R_BO:R_BO + 1, :M]
    logits = jnp.dot(h, w_o, preferred_element_type=f32) + b_o  # (BS, M)

    z = logits - jnp.max(logits, axis=1, keepdims=True)
    ez = jnp.exp(z)
    alpha = ez / jnp.sum(ez, axis=1, keepdims=True)             # (BS, M) softmax

    # expand alpha rows to the collapsed (b*t) axis with a tiny selection matmul
    i_idx = lax.broadcasted_iota(jnp.int32, (BT, BS), 0)
    b_idx = lax.broadcasted_iota(jnp.int32, (BT, BS), 1)
    sel = ((i_idx >= b_idx * T) & (i_idx < (b_idx + 1) * T)).astype(f32)
    alpha_bt = jnp.dot(sel, alpha, preferred_element_type=f32)  # (BT, M)

    # ---------------- ensemble log-mixture (stabilized) ---------------------
    lps = [stack_ref[m].astype(f32) for m in range(M)]          # M x (BT, V_PAD)
    m_max = lps[0]
    for m in range(1, M):
        m_max = jnp.maximum(m_max, lps[m])
    acc = jnp.zeros((BT, V_PAD), f32)
    for m in range(M):                                          # M=3, static unroll
        acc = acc + alpha_bt[:, m:m + 1] * jnp.exp(lps[m] - m_max)
    pred = m_max + jnp.log(acc)                                 # (BT, V_PAD)
    pred_ref[...] = pred                                        # lane-dense store

    # ---------------- reward gather + pad-masked mean (loss) ----------------
    y = y_ref[...]                                              # (BT, 1) i32
    iota_voc = lax.broadcasted_iota(jnp.int32, (BT, V_PAD), 1)
    onehot_y = (iota_voc == y).astype(f32)                      # (BT, V_PAD)
    no_pad = (y != PAD).astype(f32)                             # (BT, 1)
    rew = jnp.sum(pred * onehot_y, axis=1, keepdims=True)       # (BT, 1)
    rew_sum = jnp.sum(rew * no_pad, axis=0, keepdims=True)      # (1, 1)
    cnt = jnp.sum(no_pad, axis=0, keepdims=True)                # (1, 1)
    loss_ref[...] = -(rew_sum / cnt)


# ---------------------------------------------------------------- wrapper ----
def _full_spec(shape):
    n = len(shape)
    return pl.BlockSpec(shape, lambda i, _n=n: (0,) * _n)


def alpha_forward(x_de, x_en, member_logprobs_mbtv, p):
    # member_logprobs_mbtv: (M, BS, T, V_EN) bf16 - stand-in for
    # tuple(m.forward(x_de, x_en)[3] for m in self.members) (external models),
    # consumed in its native layout.
    x_de_col = x_de.astype(jnp.int32).reshape(BS * SEQ_DE, 1)
    y = x_en[:, 1:].astype(jnp.int32)                           # (BS, T)
    y_col = y.reshape(BT, 1)
    # collapse (BS,T) and lane-pad vocab 40 -> 128 with a large-negative fill
    # so the mixture runs full-width and the pred store is unmasked.  At real
    # vocab sizes (multiples of 128) this pad disappears.
    stack = member_logprobs_mbtv.reshape(M, BT, V_EN)
    stack = jnp.pad(stack, ((0, 0), (0, 0), (0, V_PAD - V_EN)),
                    constant_values=NEG_FILL)

    pred_flat, loss11 = pl.pallas_call(
        alpha_fused_kernel,
        out_shape=(jax.ShapeDtypeStruct((BT, V_PAD), jnp.float32),
                   jax.ShapeDtypeStruct((1, 1), jnp.float32)),
        grid=(1,),
        in_specs=[
            _full_spec((BS * SEQ_DE, 1)),      # x_de token ids
            _full_spec((BT, 1)),               # gather targets y = x_en[:, 1:]
            _full_spec((V_DE, E)),             # embedding table (VMEM resident)
            _full_spec((GP_ROWS, 5 * E)),      # packed gating parameters
            _full_spec((M, BT, V_PAD)),        # member log-probs (bf16, lane-dense)
        ],
        out_specs=(_full_spec((BT, V_PAD)),    # mixture log-probs
                   _full_spec((1, 1))),        # loss
        scratch_shapes=[pltpu.VMEM((BS, SEQ_DE + 4, E), jnp.float32)],
        compiler_params=pltpu.CompilerParams(
            dimension_semantics=("arbitrary",)),
    )(x_de_col, y_col, p["emb"], p["gp"], stack)

    loss = loss11[0, 0]
    avg_reward = -loss
    pred = pred_flat.reshape(BS, T, V_PAD)[:, :, :V_EN]         # (BS, T, V_EN)
    return loss, 0, avg_reward, pred


# ----------------------------------------------------------------- params ----
def init_params(key):
    ks = jax.random.split(key, 9)
    s = 0.1
    p = dict(
        emb=jax.random.normal(ks[0], (V_DE, E), jnp.float32) * s,
        w3=jax.random.normal(ks[1], (3, E, F1), jnp.float32) * s,   # conv3 weight
        b3=jax.random.normal(ks[2], (1, F1), jnp.float32) * s,
        w5=jax.random.normal(ks[3], (5, E, F2), jnp.float32) * s,   # conv5 weight
        b5=jax.random.normal(ks[4], (1, F2), jnp.float32) * s,
        wh=jax.random.normal(ks[5], (FC, L), jnp.float32) * s,      # hidden Linear
        bh=jax.random.normal(ks[6], (1, L), jnp.float32) * s,
        wo=jax.random.normal(ks[7], (L, M), jnp.float32) * s,       # output Linear
        bo=jax.random.normal(ks[8], (1, M), jnp.float32) * s,
    )
    # one-time fusion of the conv weights into the block-structured im2col
    # matrix, stored transposed (lane-dense (FC, 5E)).
    wconv = jnp.zeros((5, E, FC), jnp.float32)
    wconv = wconv.at[1:4, :, :F1].set(p["w3"])    # conv3 -> taps 1..3, first F1 cols
    wconv = wconv.at[:, :, F1:].set(p["w5"])      # conv5 -> all 5 taps, last F2 cols
    wconv_t = wconv.reshape(5 * E, FC).T          # (FC, 5E)

    # pack all six gating parameters into one buffer (fewer, denser input DMAs)
    gp = jnp.zeros((GP_ROWS, 5 * E), jnp.float32)
    gp = gp.at[R_WCONV:R_WCONV + FC, :].set(wconv_t)
    gp = gp.at[R_BCONV, :FC].set(jnp.concatenate([p["b3"][0], p["b5"][0]]))
    gp = gp.at[R_WH:R_WH + FC, :L].set(p["wh"])
    gp = gp.at[R_BH, :L].set(p["bh"][0])
    gp = gp.at[R_WO:R_WO + L, :M].set(p["wo"])
    gp = gp.at[R_BO, :M].set(p["bo"][0])
    p["gp"] = gp
    return p


# -------------------------------------------------------------- reference ----
def ref_forward(x_de, x_en, member_logprobs_mbtv, p):
    hi = jax.lax.Precision.HIGHEST
    emb = p["emb"][x_de]
    xp = jnp.pad(emb, ((0, 0), (2, 2), (0, 0)))
    fw3 = sum(jnp.einsum("bse,ef->bsf", xp[:, 1 + k:1 + k + SEQ_DE, :],
                         p["w3"][k], precision=hi) for k in range(3)) + p["b3"][None]
    fw5 = sum(jnp.einsum("bse,ef->bsf", xp[:, k:k + SEQ_DE, :],
                         p["w5"][k], precision=hi) for k in range(5)) + p["b5"][None]
    feat = jnp.concatenate([fw3.max(axis=1), fw5.max(axis=1)], axis=1)
    h = jnp.dot(feat, p["wh"], precision=hi) + p["bh"]
    logits = jnp.dot(h, p["wo"], precision=hi) + p["bo"]
    alpha = jax.nn.softmax(logits, axis=1)[:, None, None, :]          # (BS,1,1,M)
    stack = jnp.transpose(member_logprobs_mbtv.astype(jnp.float32),
                          (1, 2, 3, 0))                               # (BS,T,V,M)
    pred = jnp.log(jnp.sum(jnp.exp(stack) * alpha, axis=3))           # (BS,T,V)
    y = x_en[:, 1:]
    reward = jnp.take_along_axis(pred, y[..., None], axis=2)[..., 0]
    no_pad = (y != PAD)
    loss = -jnp.sum(reward * no_pad) / jnp.sum(no_pad)
    return loss, pred


# ------------------------------------------------------------------- main ----
if __name__ == "__main__":
    key = jax.random.PRNGKey(0)
    kp, kx, km = jax.random.split(key, 3)
    params = init_params(kp)

    x_de = jax.random.randint(kx, (BS, SEQ_DE), 0, V_DE, dtype=jnp.int32)
    x_en = jnp.array([[SOS, 5, 9, 3, 7, PAD, PAD, PAD],
                      [SOS, 4, 6, 8, 10, 12, 3, PAD]], dtype=jnp.int32)
    member_logits = jax.random.normal(km, (M, BS, T, V_EN), jnp.float32)
    # HBM-resident member log-probs kept in bf16 (dominant-tensor bandwidth)
    member_logprobs = jax.nn.log_softmax(member_logits, axis=-1).astype(jnp.bfloat16)

    loss, _, avg_reward, pred = alpha_forward(x_de, x_en, member_logprobs, params)
    jax.block_until_ready((loss, avg_reward, pred))

    ref_loss, ref_pred = ref_forward(x_de, x_en, member_logprobs, params)
    np.testing.assert_allclose(np.asarray(pred), np.asarray(ref_pred),
                               rtol=2e-3, atol=2e-3)
    np.testing.assert_allclose(float(loss), float(ref_loss), rtol=2e-3, atol=2e-3)
    np.testing.assert_allclose(float(avg_reward), -float(loss), rtol=1e-6, atol=1e-6)

    print("KERNEL_OK")
</pallas_src>

<mosaic_0001>
module attributes {stable_mosaic.version = 11 : i64} {
  func.func @alpha_fused_kernel(%arg0: i32, %arg1: memref<32x1xi32, #tpu.memory_space<vmem>>, %arg2: memref<14x1xi32, #tpu.memory_space<vmem>>, %arg3: memref<50x32xf32, #tpu.memory_space<vmem>>, %arg4: memref<104x160xf32, #tpu.memory_space<vmem>>, %arg5: memref<3x14x128xbf16, #tpu.memory_space<vmem>>, %arg6: memref<14x128xf32, #tpu.memory_space<vmem>>, %arg7: memref<1x1xf32, #tpu.memory_space<vmem>>, %arg8: memref<2x20x32xf32, #tpu.memory_space<vmem>>) attributes {dimension_semantics = [#tpu.dimension_semantics<arbitrary>], iteration_bounds = array<i64: 1>, scalar_prefetch = 0 : i64, scratch_operands = 1 : i64, tpu.core_type = #tpu.core_type<tc>, window_params = [{pipeline_mode = #tpu.pipeline_mode<synchronous>, transform_indices = @transform_0, window_bounds = array<i64: 32, 1>}, {pipeline_mode = #tpu.pipeline_mode<synchronous>, transform_indices = @transform_1, window_bounds = array<i64: 14, 1>}, {pipeline_mode = #tpu.pipeline_mode<synchronous>, transform_indices = @transform_2, window_bounds = array<i64: 50, 32>}, {pipeline_mode = #tpu.pipeline_mode<synchronous>, transform_indices = @transform_3, window_bounds = array<i64: 104, 160>}, {pipeline_mode = #tpu.pipeline_mode<synchronous>, transform_indices = @transform_4, window_bounds = array<i64: 3, 14, 128>}, {pipeline_mode = #tpu.pipeline_mode<synchronous>, transform_indices = @transform_5, window_bounds = array<i64: 14, 128>}, {pipeline_mode = #tpu.pipeline_mode<synchronous>, transform_indices = @transform_6, window_bounds = array<i64: 1, 1>}]} {
    %c0 = arith.constant 0 : index
    %c0_0 = arith.constant 0 : index
    %0 = vector.load %arg1[%c0, %c0_0] : memref<32x1xi32, #tpu.memory_space<vmem>>, vector<32x1xi32>
    %1 = tpu.iota {dimensions = array<i32: 1>} : vector<32x50xi32>
    %2 = vector.broadcast %0 : vector<32x1xi32> to vector<32x50xi32>
    %3 = arith.cmpi eq, %1, %2 : vector<32x50xi32>
    %4 = arith.extui %3 : vector<32x50xi1> to vector<32x50xi32>
    %5 = arith.sitofp %4 : vector<32x50xi32> to vector<32x50xf32>
    %c0_1 = arith.constant 0 : index
    %c0_2 = arith.constant 0 : index
    %6 = vector.load %arg3[%c0_1, %c0_2] : memref<50x32xf32, #tpu.memory_space<vmem>>, vector<50x32xf32>
    %cst = arith.constant dense<0.000000e+00> : vector<32x32xf32>
    %7 = tpu.matmul %5, %6, %cst {dimension_numbers = #tpu.dot_dimension_numbers<[1], [0], [0], [1], [0, 0, 1, 1], [], []>} : vector<32x50xf32>, vector<50x32xf32>, vector<32x32xf32> -> vector<32x32xf32>
    %cst_3 = arith.constant 0.000000e+00 : f32
    %8 = vector.broadcast %cst_3 : f32 to vector<2x20x32xf32>
    %c0_4 = arith.constant 0 : index
    %c0_5 = arith.constant 0 : index
    %c0_6 = arith.constant 0 : index
    %9 = vector.load %arg8[%c0_4, %c0_5, %c0_6] : memref<2x20x32xf32, #tpu.memory_space<vmem>>, vector<2x20x32xf32>
    tpu.vector_store %arg8[%c0_4, %c0_5, %c0_6], %8 {strides = array<i32>} : memref<2x20x32xf32, #tpu.memory_space<vmem>>, vector<2x20x32xf32>,
    %10 = vector.extract_strided_slice %7 {offsets = [0, 0], sizes = [16, 32], strides = [1, 1]} : vector<32x32xf32> to vector<16x32xf32>
    %c0_7 = arith.constant 0 : index
    %c2 = arith.constant 2 : index
    %c0_8 = arith.constant 0 : index
    %11 = vector.load %arg8[%c0_7, %c2, %c0_8] : memref<2x20x32xf32, #tpu.memory_space<vmem>>, vector<1x16x32xf32>
    %12 = vector.shape_cast %11 : vector<1x16x32xf32> to vector<16x32xf32>
    %13 = vector.shape_cast %10 : vector<16x32xf32> to vector<1x16x32xf32>
    tpu.vector_store %arg8[%c0_7, %c2, %c0_8], %13 {strides = array<i32>} : memref<2x20x32xf32, #tpu.memory_space<vmem>>, vector<1x16x32xf32>,
    %14 = vector.extract_strided_slice %7 {offsets = [16, 0], sizes = [16, 32], strides = [1, 1]} : vector<32x32xf32> to vector<16x32xf32>
    %c1 = arith.constant 1 : index
    %c2_9 = arith.constant 2 : index
    %c0_10 = arith.constant 0 : index
    %15 = vector.load %arg8[%c1, %c2_9, %c0_10] : memref<2x20x32xf32, #tpu.memory_space<vmem>>, vector<1x16x32xf32>
    %16 = vector.shape_cast %15 : vector<1x16x32xf32> to vector<16x32xf32>
    %17 = vector.shape_cast %14 : vector<16x32xf32> to vector<1x16x32xf32>
    tpu.vector_store %arg8[%c1, %c2_9, %c0_10], %17 {strides = array<i32>} : memref<2x20x32xf32, #tpu.memory_space<vmem>>, vector<1x16x32xf32>,
    %c0_11 = arith.constant 0 : index
    %c0_12 = arith.constant 0 : index
    %c0_13 = arith.constant 0 : index
    %18 = vector.load %arg8[%c0_11, %c0_12, %c0_13] : memref<2x20x32xf32, #tpu.memory_space<vmem>>, vector<2x16x32xf32>
    %c0_14 = arith.constant 0 : index
    %c1_15 = arith.constant 1 : index
    %c0_16 = arith.constant 0 : index
    %19 = vector.load %arg8[%c0_14, %c1_15, %c0_16] : memref<2x20x32xf32, #tpu.memory_space<vmem>>, vector<2x16x32xf32>
    %c0_17 = arith.constant 0 : index
    %c2_18 = arith.constant 2 : index
    %c0_19 = arith.constant 0 : index
    %20 = vector.load %arg8[%c0_17, %c2_18, %c0_19] : memref<2x20x32xf32, #tpu.memory_space<vmem>>, vector<2x16x32xf32>
    %c0_20 = arith.constant 0 : index
    %c3 = arith.constant 3 : index
    %c0_21 = arith.constant 0 : index
    %21 = vector.load %arg8[%c0_20, %c3, %c0_21] : memref<2x20x32xf32, #tpu.memory_space<vmem>>, vector<2x16x32xf32>
    %c0_22 = arith.constant 0 : index
    %c4 = arith.constant 4 : index
    %c0_23 = arith.constant 0 : index
    %22 = vector.load %arg8[%c0_22, %c4, %c0_23] : memref<2x20x32xf32, #tpu.memory_space<vmem>>, vector<2x16x32xf32>
    %23 = tpu.concatenate %18, %19, %20, %21, %22 in 2 : vector<2x16x32xf32>, vector<2x16x32xf32>, vector<2x16x32xf32>, vector<2x16x32xf32>, vector<2x16x32xf32> -> vector<2x16x160xf32>
    %24 = vector.shape_cast %23 : vector<2x16x160xf32> to vector<32x160xf32>
    %c0_24 = arith.constant 0 : index
    %c0_25 = arith.constant 0 : index
    %25 = vector.load %arg4[%c0_24, %c0_25] : memref<104x160xf32, #tpu.memory_space<vmem>>, vector<24x160xf32>
    %c24 = arith.constant 24 : index
    %c0_26 = arith.constant 0 : index
    %26 = vector.load %arg4[%c24, %c0_26] : memref<104x160xf32, #tpu.memory_space<vmem>>, vector<1x24xf32>
    %cst_27 = arith.constant dense<0.000000e+00> : vector<32x24xf32>
    %27 = tpu.matmul %24, %25, %cst_27 {dimension_numbers = #tpu.dot_dimension_numbers<[1], [1], [0], [0], [0, 0, 1, 0], [], []>} : vector<32x160xf32>, vector<24x160xf32>, vector<32x24xf32> -> vector<32x24xf32>
    %28 = vector.broadcast %26 : vector<1x24xf32> to vector<32x24xf32>
    %29 = arith.addf %27, %28 : vector<32x24xf32>
    %30 = vector.shape_cast %29 : vector<32x24xf32> to vector<2x16x24xf32>
    %cst_28 = arith.constant dense<0xFF800000> : vector<2x24xf32>
    %31 = vector.multi_reduction <maximumf>, %30, %cst_28 [1] : vector<2x16x24xf32> to vector<2x24xf32>
    %c32 = arith.constant 32 : index
    %c0_29 = arith.constant 0 : index
    %32 = vector.load %arg4[%c32, %c0_29] : memref<104x160xf32, #tpu.memory_space<vmem>>, vector<24x32xf32>
    %c56 = arith.constant 56 : index
    %c0_30 = arith.constant 0 : index
    %33 = vector.load %arg4[%c56, %c0_30] : memref<104x160xf32, #tpu.memory_space<vmem>>, vector<1x32xf32>
    %cst_31 = arith.constant dense<0.000000e+00> : vector<2x32xf32>
    %34 = tpu.matmul %31, %32, %cst_31 {dimension_numbers = #tpu.dot_dimension_numbers<[1], [0], [0], [1], [0, 0, 1, 1], [], []>} : vector<2x24xf32>, vector<24x32xf32>, vector<2x32xf32> -> vector<2x32xf32>
    %35 = vector.broadcast %33 : vector<1x32xf32> to vector<2x32xf32>
    %36 = arith.addf %34, %35 : vector<2x32xf32>
    %c64 = arith.constant 64 : index
    %c0_32 = arith.constant 0 : index
    %37 = vector.load %arg4[%c64, %c0_32] : memref<104x160xf32, #tpu.memory_space<vmem>>, vector<32x3xf32>
    %c96 = arith.constant 96 : index
    %c0_33 = arith.constant 0 : index
    %38 = vector.load %arg4[%c96, %c0_33] : memref<104x160xf32, #tpu.memory_space<vmem>>, vector<1x3xf32>
    %cst_34 = arith.constant dense<0.000000e+00> : vector<2x3xf32>
    %39 = tpu.matmul %36, %37, %cst_34 {dimension_numbers = #tpu.dot_dimension_numbers<[1], [0], [0], [1], [0, 0, 1, 1], [], []>} : vector<2x32xf32>, vector<32x3xf32>, vector<2x3xf32> -> vector<2x3xf32>
    %40 = vector.broadcast %38 : vector<1x3xf32> to vector<2x3xf32>
    %41 = arith.addf %39, %40 : vector<2x3xf32>
    %cst_35 = arith.constant dense<0xFF800000> : vector<2xf32>
    %42 = vector.multi_reduction <maximumf>, %41, %cst_35 [1] : vector<2x3xf32> to vector<2xf32>
    %43 = vector.shape_cast %42 : vector<2xf32> to vector<2x1xf32>
    %44 = vector.broadcast %43 : vector<2x1xf32> to vector<2x3xf32>
    %45 = arith.subf %41, %44 : vector<2x3xf32>
    %46 = math.exp %45 : vector<2x3xf32>
    %cst_36 = arith.constant dense<0.000000e+00> : vector<2xf32>
    %47 = vector.multi_reduction <add>, %46, %cst_36 [1] : vector<2x3xf32> to vector<2xf32>
    %48 = vector.shape_cast %47 : vector<2xf32> to vector<2x1xf32>
    %49 = vector.broadcast %48 : vector<2x1xf32> to vector<2x3xf32>
    %50 = arith.divf %46, %49 : vector<2x3xf32>
    %51 = tpu.iota {dimensions = array<i32: 0>} : vector<14x2xi32>
    %52 = tpu.iota {dimensions = array<i32: 1>} : vector<14x2xi32>
    %c7_i32 = arith.constant 7 : i32
    %53 = vector.broadcast %c7_i32 : i32 to vector<14x2xi32>
    %54 = arith.muli %52, %53 : vector<14x2xi32>
    %55 = arith.cmpi sge, %51, %54 : vector<14x2xi32>
    %c1_i32 = arith.constant 1 : i32
    %56 = vector.broadcast %c1_i32 : i32 to vector<14x2xi32>
    %57 = arith.addi %52, %56 : vector<14x2xi32>
    %c7_i32_37 = arith.constant 7 : i32
    %58 = vector.broadcast %c7_i32_37 : i32 to vector<14x2xi32>
    %59 = arith.muli %57, %58 : vector<14x2xi32>
    %60 = arith.cmpi slt, %51, %59 : vector<14x2xi32>
    %61 = arith.andi %55, %60 : vector<14x2xi1>
    %62 = arith.extui %61 : vector<14x2xi1> to vector<14x2xi32>
    %63 = arith.sitofp %62 : vector<14x2xi32> to vector<14x2xf32>
    %cst_38 = arith.constant dense<0.000000e+00> : vector<14x3xf32>
    %64 = tpu.matmul %63, %50, %cst_38 {dimension_numbers = #tpu.dot_dimension_numbers<[1], [0], [0], [1], [0, 0, 1, 1], [], []>} : vector<14x2xf32>, vector<2x3xf32>, vector<14x3xf32> -> vector<14x3xf32>
    %c0_39 = arith.constant 0 : index
    %c0_40 = arith.constant 0 : index
    %c0_41 = arith.constant 0 : index
    %65 = vector.load %arg5[%c0_39, %c0_40, %c0_41] : memref<3x14x128xbf16, #tpu.memory_space<vmem>>, vector<1x14x128xbf16>
    %66 = vector.shape_cast %65 : vector<1x14x128xbf16> to vector<14x128xbf16>
    %67 = arith.extf %66 : vector<14x128xbf16> to vector<14x128xf32>
    %c1_42 = arith.constant 1 : index
    %c0_43 = arith.constant 0 : index
    %c0_44 = arith.constant 0 : index
    %68 = vector.load %arg5[%c1_42, %c0_43, %c0_44] : memref<3x14x128xbf16, #tpu.memory_space<vmem>>, vector<1x14x128xbf16>
    %69 = vector.shape_cast %68 : vector<1x14x128xbf16> to vector<14x128xbf16>
    %70 = arith.extf %69 : vector<14x128xbf16> to vector<14x128xf32>
    %c2_45 = arith.constant 2 : index
    %c0_46 = arith.constant 0 : index
    %c0_47 = arith.constant 0 : index
    %71 = vector.load %arg5[%c2_45, %c0_46, %c0_47] : memref<3x14x128xbf16, #tpu.memory_space<vmem>>, vector<1x14x128xbf16>
    %72 = vector.shape_cast %71 : vector<1x14x128xbf16> to vector<14x128xbf16>
    %73 = arith.extf %72 : vector<14x128xbf16> to vector<14x128xf32>
    %74 = arith.maximumf %67, %70 : vector<14x128xf32>
    %75 = arith.maximumf %74, %73 : vector<14x128xf32>
    %cst_48 = arith.constant 0.000000e+00 : f32
    %76 = vector.broadcast %cst_48 : f32 to vector<14x128xf32>
    %77 = vector.extract_strided_slice %64 {offsets = [0, 0], sizes = [14, 1], strides = [1, 1]} : vector<14x3xf32> to vector<14x1xf32>
    %78 = arith.subf %67, %75 : vector<14x128xf32>
    %79 = math.exp %78 : vector<14x128xf32>
    %80 = vector.broadcast %77 : vector<14x1xf32> to vector<14x128xf32>
    %81 = arith.mulf %80, %79 : vector<14x128xf32>
    %82 = arith.addf %76, %81 : vector<14x128xf32>
    %83 = vector.extract_strided_slice %64 {offsets = [0, 1], sizes = [14, 1], strides = [1, 1]} : vector<14x3xf32> to vector<14x1xf32>
    %84 = arith.subf %70, %75 : vector<14x128xf32>
    %85 = math.exp %84 : vector<14x128xf32>
    %86 = vector.broadcast %83 : vector<14x1xf32> to vector<14x128xf32>
    %87 = arith.mulf %86, %85 : vector<14x128xf32>
    %88 = arith.addf %82, %87 : vector<14x128xf32>
    %89 = vector.extract_strided_slice %64 {offsets = [0, 2], sizes = [14, 1], strides = [1, 1]} : vector<14x3xf32> to vector<14x1xf32>
    %90 = arith.subf %73, %75 : vector<14x128xf32>
    %91 = math.exp %90 : vector<14x128xf32>
    %92 = vector.broadcast %89 : vector<14x1xf32> to vector<14x128xf32>
    %93 = arith.mulf %92, %91 : vector<14x128xf32>
    %94 = arith.addf %88, %93 : vector<14x128xf32>
    %95 = math.log %94 : vector<14x128xf32>
    %96 = arith.addf %75, %95 : vector<14x128xf32>
    %c0_49 = arith.constant 0 : index
    %c0_50 = arith.constant 0 : index
    %97 = vector.load %arg6[%c0_49, %c0_50] : memref<14x128xf32, #tpu.memory_space<vmem>>, vector<14x128xf32>
    tpu.vector_store %arg6[%c0_49, %c0_50], %96 {strides = array<i32>} : memref<14x128xf32, #tpu.memory_space<vmem>>, vector<14x128xf32>,
    %c0_51 = arith.constant 0 : index
    %c0_52 = arith.constant 0 : index
    %98 = vector.load %arg2[%c0_51, %c0_52] : memref<14x1xi32, #tpu.memory_space<vmem>>, vector<14x1xi32>
    %99 = tpu.iota {dimensions = array<i32: 1>} : vector<14x128xi32>
    %100 = vector.broadcast %98 : vector<14x1xi32> to vector<14x128xi32>
    %101 = arith.cmpi eq, %99, %100 : vector<14x128xi32>
    %102 = arith.extui %101 : vector<14x128xi1> to vector<14x128xi32>
    %103 = arith.sitofp %102 : vector<14x128xi32> to vector<14x128xf32>
    %c1_i32_53 = arith.constant 1 : i32
    %104 = vector.broadcast %c1_i32_53 : i32 to vector<14x1xi32>
    %105 = arith.cmpi ne, %98, %104 : vector<14x1xi32>
    %106 = arith.extui %105 : vector<14x1xi1> to vector<14x1xi32>
    %107 = arith.sitofp %106 : vector<14x1xi32> to vector<14x1xf32>
    %108 = arith.mulf %96, %103 : vector<14x128xf32>
    %cst_54 = arith.constant dense<0.000000e+00> : vector<14xf32>
    %109 = vector.multi_reduction <add>, %108, %cst_54 [1] : vector<14x128xf32> to vector<14xf32>
    %110 = vector.shape_cast %109 : vector<14xf32> to vector<14x1xf32>
    %111 = arith.mulf %110, %107 : vector<14x1xf32>
    %cst_55 = arith.constant dense<0.000000e+00> : vector<1xf32>
    %112 = vector.multi_reduction <add>, %111, %cst_55 [0] : vector<14x1xf32> to vector<1xf32>
    %113 = vector.shape_cast %112 : vector<1xf32> to vector<1x1xf32>
    %cst_56 = arith.constant dense<0.000000e+00> : vector<1xf32>
    %114 = vector.multi_reduction <add>, %107, %cst_56 [0] : vector<14x1xf32> to vector<1xf32>
    %115 = vector.shape_cast %114 : vector<1xf32> to vector<1x1xf32>
    %116 = arith.divf %113, %115 : vector<1x1xf32>
    %cst_57 = arith.constant 0.000000e+00 : f32
    %117 = vector.broadcast %cst_57 : f32 to vector<1x1xf32>
    %118 = arith.subf %117, %116 : vector<1x1xf32>
    %c0_58 = arith.constant 0 : index
    %c0_59 = arith.constant 0 : index
    %119 = vector.load %arg7[%c0_58, %c0_59] : memref<1x1xf32, #tpu.memory_space<vmem>>, vector<1x1xf32>
    tpu.vector_store %arg7[%c0_58, %c0_59], %118 {strides = array<i32>} : memref<1x1xf32, #tpu.memory_space<vmem>>, vector<1x1xf32>,
    return
  }
  func.func @transform_0(%arg0: i32) -> (i32, i32) {
    %c0_i32 = arith.constant 0 : i32
    %c0_i32_0 = arith.constant 0 : i32
    %c0_i32_1 = arith.constant 0 : i32
    return %c0_i32, %c0_i32_0 : i32, i32
  }
  func.func @transform_1(%arg0: i32) -> (i32, i32) {
    %c0_i32 = arith.constant 0 : i32
    %c0_i32_0 = arith.constant 0 : i32
    %c0_i32_1 = arith.constant 0 : i32
    return %c0_i32, %c0_i32_0 : i32, i32
  }
  func.func @transform_2(%arg0: i32) -> (i32, i32) {
    %c0_i32 = arith.constant 0 : i32
    %c0_i32_0 = arith.constant 0 : i32
    %c0_i32_1 = arith.constant 0 : i32
    return %c0_i32, %c0_i32_0 : i32, i32
  }
  func.func @transform_3(%arg0: i32) -> (i32, i32) {
    %c0_i32 = arith.constant 0 : i32
    %c0_i32_0 = arith.constant 0 : i32
    %c0_i32_1 = arith.constant 0 : i32
    return %c0_i32, %c0_i32_0 : i32, i32
  }
  func.func @transform_4(%arg0: i32) -> (i32, i32, i32) {
    %c0_i32 = arith.constant 0 : i32
    %c0_i32_0 = arith.constant 0 : i32
    %c0_i32_1 = arith.constant 0 : i32
    %c0_i32_2 = arith.constant 0 : i32
    return %c0_i32, %c0_i32_0, %c0_i32_1 : i32, i32, i32
  }
  func.func @transform_5(%arg0: i32) -> (i32, i32) {
    %c0_i32 = arith.constant 0 : i32
    %c0_i32_0 = arith.constant 0 : i32
    %c0_i32_1 = arith.constant 0 : i32
    return %c0_i32, %c0_i32_0 : i32, i32
  }
  func.func @transform_6(%arg0: i32) -> (i32, i32) {
    %c0_i32 = arith.constant 0 : i32
    %c0_i32_0 = arith.constant 0 : i32
    %c0_i32_1 = arith.constant 0 : i32
    return %c0_i32, %c0_i32_0 : i32, i32
  }
}

</mosaic_0001>

<llo_original>
// kernel: tpu_custom_call.1
$region0: #{tpu_custom_call.1}
  #allocation0 [shape = 'u32[]', space=smem, size = 0x4, offset = 0x4, fixed_abs, tag = 'smem constant byte address 0x4 - core index']
  #allocation1 [shape = 'u32[144,128]{1,0:T(1,128)}', space=vmem, size = 0x12000, scoped, tag = 'internal scratch']
  #allocation2 [shape = 'f32[2,20,32]{2,1,0:T(8,128)}', space=vmem, size = 0x6000, scoped, tag = 'scratch operand']
  %s0 = inlined_call_operand.vmem [shape: s32[32,1], index: 0, kind: input, shape index: {}]
  %s1 = inlined_call_operand.vmem [shape: s32[14,1], index: 1, kind: input, shape index: {}]
  %s2 = inlined_call_operand.vmem [shape: f32[50,32], index: 2, kind: input, shape index: {}]
  %s3 = inlined_call_operand.vmem [shape: f32[104,160], index: 3, kind: input, shape index: {}]
  %s4 = inlined_call_operand.vmem [shape: bf16[3,14,128], index: 4, kind: input, shape index: {}]
  %s5 = inlined_call_operand.hbm [shape: f32[14,128], index: 5, kind: output, shape index: {0}]
  %s6 = inlined_call_operand.hbm [shape: f32[1,1], index: 6, kind: output, shape index: {1}]
  %7 = xla_tuple %s5, %s6
  %s8 = sld [smem:[#allocation0]]
  $region38: #{tpu_custom_call.1} parent=0
    _
  %s10 = ssub.s32 1, %s8
  %s11 = scalar_select 0, %s10, %s8
  $region1: #{tpu_custom_call.1} parent=0
    #allocation3 [shape = 'u8[8192]{0}', space=vmem, size = 0x2000, scoped, tag = 'output window, operand 0, single buffered']
    #allocation4 [shape = 's32[1]{0}', space=sflag, size = 0x4, scoped, tag = 'scoped memory for tpu_custom_call.1']
    #allocation5 [shape = 'u8[512]{0}', space=vmem, size = 0x400, scoped, tag = 'output window, operand 1, single buffered']
    #allocation6 [shape = 's32[1]{0}', space=sflag, size = 0x4, scoped, tag = 'scoped memory for tpu_custom_call.1']
    %12 = vsyncpa [#allocation4], 0
    %13 = vsyncpa [#allocation6], 0
    // Predicated region
    $region2: #{tpu_custom_call.1} parent=1 // pred_check
      _
    $region3: #{tpu_custom_call.1} parent=1 // pred_check_branch
      %15 = sbr.rel (0) target = $region5
    $region4: #{tpu_custom_call.1} parent=1 // pred_region
      _
    $region5: #{tpu_custom_call.1} parent=1 // pred_fallthru
      _
    // Predicated region
    $region6: #{tpu_custom_call.1} parent=1 // pred_check
      _
    $region7: #{tpu_custom_call.1} parent=1 // pred_check_branch
      %17 = sbr.rel (0) target = $region9
    $region8: #{tpu_custom_call.1} parent=1 // pred_region
      _
    $region9: #{tpu_custom_call.1} parent=1 // pred_fallthru
      _
    // Predicated region
    $region10: #{tpu_custom_call.1} parent=1 // pred_check
      _
    $region11: #{tpu_custom_call.1} parent=1 // pred_check_branch
      %19 = sbr.rel (0) target = $region13
    $region12: #{tpu_custom_call.1} parent=1 // pred_region
      _
    $region13: #{tpu_custom_call.1} parent=1 // pred_fallthru
      _
    // Predicated region
    $region14: #{tpu_custom_call.1} parent=1 // pred_check
      _
    $region15: #{tpu_custom_call.1} parent=1 // pred_check_branch
      %21 = sbr.rel (0) target = $region17
    $region16: #{tpu_custom_call.1} parent=1 // pred_region
      _
    $region17: #{tpu_custom_call.1} parent=1 // pred_fallthru
      _
    // Predicated region
    $region18: #{tpu_custom_call.1} parent=1 // pred_check
      _
    $region19: #{tpu_custom_call.1} parent=1 // pred_check_branch
      %23 = sbr.rel (0) target = $region21
    $region20: #{tpu_custom_call.1} parent=1 // pred_region
      _
    $region21: #{tpu_custom_call.1} parent=1 // pred_fallthru
      _
    %v24 = vld [vmem:[%s0] sm:$0xff]
    %v25 = vld [vmem:[%s0 + $0x8] sm:$0xff]
    %v26 = vld [vmem:[%s0 + $0x10] sm:$0xff]
    %v27 = vld [vmem:[%s0 + $0x18] sm:$0xff]
    %v28 = vlaneseq
    %v29 = vand.u32 %v28, 127
    %30 = vset.pattern.permute.xlu0 0
    %31 = vperm.xlu0 %30, %v24
    %v32 = vpop.permute.xlu0 %31
    %33 = vset.pattern.permute.xlu0 0
    %34 = vperm.xlu0 %33, %v25
    %v35 = vpop.permute.xlu0 %34
    %36 = vset.pattern.permute.xlu0 0
    %37 = vperm.xlu0 %36, %v26
    %v38 = vpop.permute.xlu0 %37
    %39 = vset.pattern.permute.xlu0 0
    %40 = vperm.xlu0 %39, %v27
    %v41 = vpop.permute.xlu0 %40
    %vm42 = vcmp.eq.s32.totalorder %v29, %v32
    %vm43 = vcmp.eq.s32.totalorder %v29, %v35
    %vm44 = vcmp.eq.s32.totalorder %v29, %v38
    %vm45 = vcmp.eq.s32.totalorder %v29, %v41
    %v46 = vsel %vm42, 1, 0
    %v47 = vsel %vm43, 1, 0
    %v48 = vsel %vm44, 1, 0
    %v49 = vsel %vm45, 1, 0
    %v50 = vcvt.s32.f32 %v46
    %v51 = vcvt.s32.f32 %v47
    %v52 = vcvt.s32.f32 %v48
    %v53 = vcvt.s32.f32 %v49
    %v54 = vld [vmem:[%s2] sm:$0xff]
    %v55 = vld [vmem:[%s2 + $0x8] sm:$0xff]
    %v56 = vld [vmem:[%s2 + $0x10] sm:$0xff]
    %v57 = vld [vmem:[%s2 + $0x18] sm:$0xff]
    %v58 = vld [vmem:[%s2 + $0x20] sm:$0xff]
    %v59 = vld [vmem:[%s2 + $0x28] sm:$0xff]
    %v60 = vld [vmem:[%s2 + $0x30] sm:$0x3]
    %vm61 = vcmask 408576
    %v63 = vsel %vm61, %v50, 0
    %v66 = vsel %vm61, %v51, 0
    %v69 = vsel %vm61, %v52, 0
    %v72 = vsel %vm61, %v53, 0
    %vm74 = vcmask 1041408
    %v76 = vsel %vm74, %v60, 0
    %78 = vmatprep.subr.mxu0 0.0
    %79 = vmatpush1.msra.mxu0 %v54
    %80 = vmatprep.subr.mxu0 0.0
    %81 = vmatpush1.msra.mxu0 %v55
    %82 = vmatprep.subr.mxu0 0.0
    %83 = vmatpush1.msra.mxu0 %v56
    %84 = vmatprep.subr.mxu0 0.0
    %85 = vmatpush1.msra.mxu0 %v57
    %86 = vmatprep.subr.mxu0 0.0
    %87 = vmatpush1.msra.mxu0 %v58
    %88 = vmatprep.subr.mxu0 0.0
    %89 = vmatpush1.msra.mxu0 %v59
    %90 = vmatprep.subr.mxu0 0.0
    %91 = vmatpush1.msra.mxu0 %v76
    %92 = vmatprep.subr.mxu0 0.0
    %93 = vmatpush1.msra.mxu0 0.0
    %94 = vmatprep.subr.mxu0 0.0
    %95 = vmatpush1.msra.mxu0 0.0
    %96 = vmatprep.subr.mxu0 0.0
    %97 = vmatpush1.msra.mxu0 0.0
    %98 = vmatprep.subr.mxu0 0.0
    %99 = vmatpush1.msra.mxu0 0.0
    %100 = vmatprep.subr.mxu0 0.0
    %101 = vmatpush1.msra.mxu0 0.0
    %102 = vmatprep.subr.mxu0 0.0
    %103 = vmatpush1.msra.mxu0 0.0
    %104 = vmatprep.subr.mxu0 0.0
    %105 = vmatpush1.msra.mxu0 0.0
    %106 = vmatprep.subr.mxu0 0.0
    %107 = vmatpush1.msra.mxu0 0.0
    %108 = vmatprep.subr.mxu0 0.0
    %109 = vmatpush1.msra.mxu0 0.0
    %110 = vmatprep.subr.mxu0 0.0
    %111 = vmatpush1.msra.mxu0 0.0
    %112 = vmatprep.subr.mxu0 0.0
    %113 = vmatpush1.msra.mxu0 0.0
    %114 = vmatprep.subr.mxu0 0.0
    %115 = vmatpush1.msra.mxu0 0.0
    %116 = vmatprep.subr.mxu0 0.0
    %117 = vmatpush1.msra.mxu0 0.0
    %118 = vmatprep.subr.mxu0 0.0
    %119 = vmatpush1.msra.mxu0 0.0
    %120 = vmatprep.subr.mxu0 0.0
    %121 = vmatpush1.msra.mxu0 0.0
    %122 = vmatprep.subr.mxu0 0.0
    %123 = vmatpush1.msra.mxu0 0.0
    %124 = vmatprep.subr.mxu0 0.0
    %125 = vmatpush1.msra.mxu0 0.0
    %126 = vmatprep.subr.mxu0 0.0
    %127 = vmatpush1.msra.mxu0 0.0
    %128 = vmatprep.subr.mxu0 0.0
    %129 = vmatpush1.msra.mxu0 0.0
    %130 = vmatprep.subr.mxu0 0.0
    %131 = vmatpush1.msra.mxu0 0.0
    %132 = vmatprep.subr.mxu0 0.0
    %133 = vmatpush1.msra.mxu0 0.0
    %134 = vmatprep.subr.mxu0 0.0
    %135 = vmatpush1.msra.mxu0 0.0
    %136 = vmatprep.subr.mxu0 0.0
    %137 = vmatpush1.msra.mxu0 0.0
    %138 = vmatprep.subr.mxu0 0.0
    %139 = vmatpush1.msra.mxu0 0.0
    %140 = vmatprep.subr.mxu0 0.0
    %141 = vmatpush1.msra.mxu0 0.0
    %142 = vmatprep.mubr.f32.mxu0 0.0
    %143 = vmatmul.mubr.f32.gmra.mrb[0].mxu0 %v63
    %v144 = vpop.f32.mrb[0].mxu0
    %v145 = vadd.f32 0.0, %v144
    %v146 = vpop.f32.mrb[0].mxu0
    %147 = vmatprep.mubr.f32.mxu0 0.0
    %148 = vmatmul.mubr.f32.gmra.mrb[0].mxu0 %v66
    %v149 = vpop.f32.mrb[0].mxu0
    %v150 = vadd.f32 0.0, %v149
    %v151 = vpop.f32.mrb[0].mxu0
    %152 = vmatprep.mubr.f32.mxu0 0.0
    %153 = vmatmul.mubr.f32.gmra.mrb[0].mxu0 %v69
    %v154 = vpop.f32.mrb[0].mxu0
    %v155 = vadd.f32 0.0, %v154
    %v156 = vpop.f32.mrb[0].mxu0
    %157 = vmatprep.mubr.f32.mxu0 0.0
    %158 = vmatmul.mubr.f32.gmra.mrb[0].mxu0 %v72
    %v159 = vpop.f32.mrb[0].mxu0
    %v160 = vadd.f32 0.0, %v159
    %v161 = vpop.f32.mrb[0].mxu0
    %162 = vdwg.mxu0
    %vm163 = vcmask 261120
    %164 = vst.msk [vmem:[#allocation2] sm:$0xff] %vm163, 0.0
    %165 = vst.msk [vmem:[#allocation2 + $0x8] sm:$0xff] %vm163, 0.0
    %vm166 = vcmask 257024
    %167 = vst.msk [vmem:[#allocation2 + $0x10] sm:$0xf] %vm166, 0.0
    %168 = vst.msk [vmem:[#allocation2 + $0x18] sm:$0xff] %vm163, 0.0
    %169 = vst.msk [vmem:[#allocation2 + $0x20] sm:$0xff] %vm163, 0.0
    %170 = vst.msk [vmem:[#allocation2 + $0x28] sm:$0xf] %vm166, 0.0
    %171 = vst.msk [vmem:[#allocation2 + $0x2] sm:$0xff] %vm163, %v145
    %172 = vst.msk [vmem:[#allocation2 + $0xa] sm:$0xff] %vm163, %v150
    %s173 = scalar_lea.vmem [#allocation2], 24
    %174 = vst.msk [vmem:[%s173 + $0x2] sm:$0xff] %vm163, %v155
    %175 = vst.msk [vmem:[%s173 + $0xa] sm:$0xff] %vm163, %v160
    %v176 = vld [vmem:[#allocation2] sm:$0xff]
    %v177 = vld [vmem:[#allocation2 + $0x8] sm:$0xff]
    %v178 = vld [vmem:[#allocation2 + $0x18] sm:$0xff]
    %v179 = vld [vmem:[#allocation2 + $0x20] sm:$0xff]
    %v180 = vld [vmem:[#allocation2 + $0x1] sm:$0xff]
    %v181 = vld [vmem:[#allocation2 + $0x9] sm:$0xff]
    %v182 = vld [vmem:[#allocation2 + $0x19] sm:$0xff]
    %v183 = vld [vmem:[#allocation2 + $0x21] sm:$0xff]
    %v184 = vld [vmem:[#allocation2 + $0x2] sm:$0xff]
    %v185 = vld [vmem:[#allocation2 + $0xa] sm:$0xff]
    %v186 = vld [vmem:[#allocation2 + $0x1a] sm:$0xff]
    %v187 = vld [vmem:[#allocation2 + $0x22] sm:$0xff]
    %v188 = vld [vmem:[#allocation2 + $0x3] sm:$0xff]
    %v189 = vld [vmem:[#allocation2 + $0xb] sm:$0xff]
    %v190 = vld [vmem:[#allocation2 + $0x1b] sm:$0xff]
    %v191 = vld [vmem:[#allocation2 + $0x23] sm:$0xff]
    %v192 = vld [vmem:[#allocation2 + $0x4] sm:$0xff]
    %v193 = vld [vmem:[#allocation2 + $0xc] sm:$0xff]
    %v194 = vld [vmem:[#allocation2 + $0x1c] sm:$0xff]
    %v195 = vld [vmem:[#allocation2 + $0x24] sm:$0xff]
    %200 = vrot.lane.b32.xlu0 %v180, 32
    %v201 = vpop.permute.xlu0 %200
    %202 = vrot.lane.b32.xlu0 %v181, 32
    %v203 = vpop.permute.xlu0 %202
    %204 = vrot.lane.b32.xlu0 %v182, 32
    %v205 = vpop.permute.xlu0 %204
    %206 = vrot.lane.b32.xlu0 %v183, 32
    %v207 = vpop.permute.xlu0 %206
    %216 = vrot.lane.b32.xlu0 %v184, 64
    %v217 = vpop.permute.xlu0 %216
    %218 = vrot.lane.b32.xlu0 %v185, 64
    %v219 = vpop.permute.xlu0 %218
    %220 = vrot.lane.b32.xlu0 %v186, 64
    %v221 = vpop.permute.xlu0 %220
    %222 = vrot.lane.b32.xlu0 %v187, 64
    %v223 = vpop.permute.xlu0 %222
    %232 = vrot.lane.b32.xlu0 %v188, 96
    %v233 = vpop.permute.xlu0 %232
    %234 = vrot.lane.b32.xlu0 %v189, 96
    %v235 = vpop.permute.xlu0 %234
    %236 = vrot.lane.b32.xlu0 %v190, 96
    %v237 = vpop.permute.xlu0 %236
    %238 = vrot.lane.b32.xlu0 %v191, 96
    %v239 = vpop.permute.xlu0 %238
    %v244 = vsel %vm163, %v176, %v201
    %v245 = vsel %vm163, %v177, %v203
    %v246 = vsel %vm163, %v178, %v205
    %v247 = vsel %vm163, %v179, %v207
    %vm248 = vcmask 523264
    %v249 = vsel %vm248, %v244, %v217
    %v250 = vsel %vm248, %v245, %v219
    %v251 = vsel %vm248, %v246, %v221
    %v252 = vsel %vm248, %v247, %v223
    %vm253 = vcmask 785408
    %v254 = vsel %vm253, %v249, %v233
    %v255 = vsel %vm253, %v250, %v235
    %v256 = vsel %vm253, %v251, %v237
    %v257 = vsel %vm253, %v252, %v239
    %v258 = vld [vmem:[%s3] sm:$0xff]
    %v259 = vld [vmem:[%s3 + $0x8] sm:$0xff]
    %v260 = vld [vmem:[%s3 + $0x10] sm:$0xff]
    %v261 = vld [vmem:[%s3 + $0x18] sm:$0xff]
    %v262 = vld [vmem:[%s3 + $0x20] sm:$0xff]
    %v263 = vld [vmem:[%s3 + $0x28] sm:$0xff]
    %v264 = vld [vmem:[%s3 + $0x30] ss:$0 sm:$0xff]
    %v266 = vsel %vm163, %v192, 0
    %v269 = vsel %vm163, %v193, 0
    %v272 = vsel %vm163, %v194, 0
    %v275 = vsel %vm163, %v195, 0
    %v278 = vsel %vm163, %v259, 0
    %v281 = vsel %vm163, %v261, 0
    %v284 = vsel %vm163, %v263, 0
    %286 = vmatprep.subr.mxu0 %v278
    %287 = vmatpush1.xpose.msra.mxu0 %v258
    %288 = vmatprep.subr.mxu0 %v281
    %289 = vmatpush1.xpose.msra.mxu0 %v260
    %290 = vmatprep.subr.mxu0 %v284
    %291 = vmatpush1.xpose.msra.mxu0 %v262
    %292 = vmatprep.subr.mxu0 0.0
    %293 = vmatpush1.xpose.msra.mxu0 0.0
    %294 = vmatprep.subr.mxu0 0.0
    %295 = vmatpush1.xpose.msra.mxu0 0.0
    %296 = vmatprep.subr.mxu0 0.0
    %297 = vmatpush1.xpose.msra.mxu0 0.0
    %298 = vmatprep.subr.mxu0 0.0
    %299 = vmatpush1.xpose.msra.mxu0 0.0
    %300 = vmatprep.subr.mxu0 0.0
    %301 = vmatpush1.xpose.msra.mxu0 0.0
    %302 = vmatprep.subr.mxu0 0.0
    %303 = vmatpush1.xpose.msra.mxu0 0.0
    %304 = vmatprep.subr.mxu0 0.0
    %305 = vmatpush1.xpose.msra.mxu0 0.0
    %306 = vmatprep.subr.mxu0 0.0
    %307 = vmatpush1.xpose.msra.mxu0 0.0
    %308 = vmatprep.subr.mxu0 0.0
    %309 = vmatpush1.xpose.msra.mxu0 0.0
    %310 = vmatprep.subr.mxu0 0.0
    %311 = vmatpush1.xpose.msra.mxu0 0.0
    %312 = vmatprep.subr.mxu0 0.0
    %313 = vmatpush1.xpose.msra.mxu0 0.0
    %314 = vmatprep.subr.mxu0 0.0
    %315 = vmatpush1.xpose.msra.mxu0 0.0
    %316 = vmatprep.subr.mxu0 0.0
    %317 = vmatpush1.xpose.msra.mxu0 0.0
    %318 = vmatprep.subr.mxu0 0.0
    %319 = vmatpush1.xpose.msra.mxu0 0.0
    %320 = vmatprep.subr.mxu0 0.0
    %321 = vmatpush1.xpose.msra.mxu0 0.0
    %322 = vmatprep.subr.mxu0 0.0
    %323 = vmatpush1.xpose.msra.mxu0 0.0
    %324 = vmatprep.subr.mxu0 0.0
    %325 = vmatpush1.xpose.msra.mxu0 0.0
    %326 = vmatprep.subr.mxu0 0.0
    %327 = vmatpush1.xpose.msra.mxu0 0.0
    %328 = vmatprep.subr.mxu0 0.0
    %329 = vmatpush1.xpose.msra.mxu0 0.0
    %330 = vmatprep.subr.mxu0 0.0
    %331 = vmatpush1.xpose.msra.mxu0 0.0
    %332 = vmatprep.subr.mxu0 0.0
    %333 = vmatpush1.xpose.msra.mxu0 0.0
    %334 = vmatprep.subr.mxu0 0.0
    %335 = vmatpush1.xpose.msra.mxu0 0.0
    %336 = vmatprep.subr.mxu0 0.0
    %337 = vmatpush1.xpose.msra.mxu0 0.0
    %338 = vmatprep.subr.mxu0 0.0
    %339 = vmatpush1.xpose.msra.mxu0 0.0
    %340 = vmatprep.subr.mxu0 0.0
    %341 = vmatpush1.xpose.msra.mxu0 0.0
    %342 = vmatprep.subr.mxu0 0.0
    %343 = vmatpush1.xpose.msra.mxu0 0.0
    %344 = vmatprep.subr.mxu0 0.0
    %345 = vmatpush1.xpose.msra.mxu0 0.0
    %346 = vmatprep.subr.mxu0 0.0
    %347 = vmatpush1.xpose.msra.mxu0 0.0
    %348 = vmatprep.subr.mxu0 0.0
    %349 = vmatpush1.xpose.msra.mxu0 0.0
    %350 = vmatprep.mubr.f32.mxu0 %v266
    %351 = vmatmul.mubr.f32.gmra.mrb[0].mxu0 %v254
    %v352 = vpop.f32.mrb[0].mxu0
    %v353 = vadd.f32 %v264, %v352
    %v354 = vpop.f32.mrb[0].mxu0
    %355 = vmatprep.mubr.f32.mxu0 %v269
    %356 = vmatmul.mubr.f32.gmra.mrb[0].mxu0 %v255
    %v357 = vpop.f32.mrb[0].mxu0
    %v358 = vadd.f32 %v264, %v357
    %v359 = vpop.f32.mrb[0].mxu0
    %360 = vmatprep.mubr.f32.mxu0 %v272
    %361 = vmatmul.mubr.f32.gmra.mrb[0].mxu0 %v256
    %v362 = vpop.f32.mrb[0].mxu0
    %v363 = vadd.f32 %v264, %v362
    %v364 = vpop.f32.mrb[0].mxu0
    %365 = vmatprep.mubr.f32.mxu0 %v275
    %366 = vmatmul.mubr.f32.gmra.mrb[0].mxu0 %v257
    %v367 = vpop.f32.mrb[0].mxu0
    %v368 = vadd.f32 %v264, %v367
    %v369 = vpop.f32.mrb[0].mxu0
    %370 = vdwg.mxu0
    %vm371 = vcmask 195584
    %v372 = vsel %vm371, %v353, -inf
    %v373 = vsel %vm371, %v358, -inf
    %v374 = vmax.f32 %v372, %v373
    %v375 = vrot.slane %v374, 4
    %v376 = vmax.f32 %v374, %v375
    %v377 = vrot.slane %v376, 2
    %v378 = vmax.f32 %v376, %v377
    %v379 = vrot.slane %v378, 1
    %v380 = vmax.f32 %v378, %v379
    %v381 = vsel %vm371, %v363, -inf
    %v382 = vsel %vm371, %v368, -inf
    %v383 = vmax.f32 %v381, %v382
    %v384 = vrot.slane %v383, 4
    %v385 = vmax.f32 %v383, %v384
    %v386 = vrot.slane %v385, 2
    %v387 = vmax.f32 %v385, %v386
    %v388 = vrot.slane %v387, 1
    %v389 = vmax.f32 %v387, %v388
    %v390 = vld [vmem:[%s3 + $0x40] sm:$0xff]
    %v391 = vld [vmem:[%s3 + $0x50] sm:$0xff]
    %v392 = vld [vmem:[%s3 + $0x60] sm:$0xff]
    %v393 = vld [vmem:[%s3 + $0x70] ss:$0 sm:$0xff]
    %vm396 = vcmask 1041409
    %v397 = vsel %vm396, %v389, %v380
    %v398 = vsel %vm371, %v397, 0
    %400 = vmatprep.subr.mxu0 0.0
    %401 = vmatpush1.msra.mxu0 %v390
    %402 = vmatprep.subr.mxu0 0.0
    %403 = vmatpush1.msra.mxu0 %v391
    %404 = vmatprep.subr.mxu0 0.0
    %405 = vmatpush1.msra.mxu0 %v392
    %406 = vmatprep.subr.mxu0 0.0
    %407 = vmatpush1.msra.mxu0 0.0
    %408 = vmatprep.subr.mxu0 0.0
    %409 = vmatpush1.msra.mxu0 0.0
    %410 = vmatprep.subr.mxu0 0.0
    %411 = vmatpush1.msra.mxu0 0.0
    %412 = vmatprep.subr.mxu0 0.0
    %413 = vmatpush1.msra.mxu0 0.0
    %414 = vmatprep.subr.mxu0 0.0
    %415 = vmatpush1.msra.mxu0 0.0
    %416 = vmatprep.subr.mxu0 0.0
    %417 = vmatpush1.msra.mxu0 0.0
    %418 = vmatprep.subr.mxu0 0.0
    %419 = vmatpush1.msra.mxu0 0.0
    %420 = vmatprep.subr.mxu0 0.0
    %421 = vmatpush1.msra.mxu0 0.0
    %422 = vmatprep.subr.mxu0 0.0
    %423 = vmatpush1.msra.mxu0 0.0
    %424 = vmatprep.subr.mxu0 0.0
    %425 = vmatpush1.msra.mxu0 0.0
    %426 = vmatprep.subr.mxu0 0.0
    %427 = vmatpush1.msra.mxu0 0.0
    %428 = vmatprep.subr.mxu0 0.0
    %429 = vmatpush1.msra.mxu0 0.0
    %430 = vmatprep.subr.mxu0 0.0
    %431 = vmatpush1.msra.mxu0 0.0
    %432 = vmatprep.subr.mxu0 0.0
    %433 = vmatpush1.msra.mxu0 0.0
    %434 = vmatprep.subr.mxu0 0.0
    %435 = vmatpush1.msra.mxu0 0.0
    %436 = vmatprep.subr.mxu0 0.0
    %437 = vmatpush1.msra.mxu0 0.0
    %438 = vmatprep.subr.mxu0 0.0
    %439 = vmatpush1.msra.mxu0 0.0
    %440 = vmatprep.subr.mxu0 0.0
    %441 = vmatpush1.msra.mxu0 0.0
    %442 = vmatprep.subr.mxu0 0.0
    %443 = vmatpush1.msra.mxu0 0.0
    %444 = vmatprep.subr.mxu0 0.0
    %445 = vmatpush1.msra.mxu0 0.0
    %446 = vmatprep.subr.mxu0 0.0
    %447 = vmatpush1.msra.mxu0 0.0
    %448 = vmatprep.subr.mxu0 0.0
    %449 = vmatpush1.msra.mxu0 0.0
    %450 = vmatprep.subr.mxu0 0.0
    %451 = vmatpush1.msra.mxu0 0.0
    %452 = vmatprep.subr.mxu0 0.0
    %453 = vmatpush1.msra.mxu0 0.0
    %454 = vmatprep.subr.mxu0 0.0
    %455 = vmatpush1.msra.mxu0 0.0
    %456 = vmatprep.subr.mxu0 0.0
    %457 = vmatpush1.msra.mxu0 0.0
    %458 = vmatprep.subr.mxu0 0.0
    %459 = vmatpush1.msra.mxu0 0.0
    %460 = vmatprep.subr.mxu0 0.0
    %461 = vmatpush1.msra.mxu0 0.0
    %462 = vmatprep.subr.mxu0 0.0
    %463 = vmatpush1.msra.mxu0 0.0
    %464 = vmatprep.mubr.f32.mxu0 0.0
    %465 = vmatmul.mubr.f32.gmra.mrb[0].mxu0 %v398
    %v466 = vpop.f32.mrb[0].mxu0
    %v467 = vadd.f32 %v393, %v466
    %v468 = vpop.f32.mrb[0].mxu0
    %469 = vdwg.mxu0
    %v470 = vld [vmem:[%s3 + $0x80] sm:$0xff]
    %v471 = vld [vmem:[%s3 + $0x90] sm:$0xff]
    %v472 = vld [vmem:[%s3 + $0xa0] sm:$0xff]
    %v473 = vld [vmem:[%s3 + $0xb0] sm:$0xff]
    %v474 = vld [vmem:[%s3 + $0xc0] ss:$0 sm:$0xff]
    %v476 = vsel %vm163, %v467, 0
    %478 = vmatprep.subr.mxu0 0.0
    %479 = vmatpush1.msra.mxu0 %v470
    %480 = vmatprep.subr.mxu0 0.0
    %481 = vmatpush1.msra.mxu0 %v471
    %482 = vmatprep.subr.mxu0 0.0
    %483 = vmatpush1.msra.mxu0 %v472
    %484 = vmatprep.subr.mxu0 0.0
    %485 = vmatpush1.msra.mxu0 %v473
    %486 = vmatprep.subr.mxu0 0.0
    %487 = vmatpush1.msra.mxu0 0.0
    %488 = vmatprep.subr.mxu0 0.0
    %489 = vmatpush1.msra.mxu0 0.0
    %490 = vmatprep.subr.mxu0 0.0
    %491 = vmatpush1.msra.mxu0 0.0
    %492 = vmatprep.subr.mxu0 0.0
    %493 = vmatpush1.msra.mxu0 0.0
    %494 = vmatprep.subr.mxu0 0.0
    %495 = vmatpush1.msra.mxu0 0.0
    %496 = vmatprep.subr.mxu0 0.0
    %497 = vmatpush1.msra.mxu0 0.0
    %498 = vmatprep.subr.mxu0 0.0
    %499 = vmatpush1.msra.mxu0 0.0
    %500 = vmatprep.subr.mxu0 0.0
    %501 = vmatpush1.msra.mxu0 0.0
    %502 = vmatprep.subr.mxu0 0.0
    %503 = vmatpush1.msra.mxu0 0.0
    %504 = vmatprep.subr.mxu0 0.0
    %505 = vmatpush1.msra.mxu0 0.0
    %506 = vmatprep.subr.mxu0 0.0
    %507 = vmatpush1.msra.mxu0 0.0
    %508 = vmatprep.subr.mxu0 0.0
    %509 = vmatpush1.msra.mxu0 0.0
    %510 = vmatprep.subr.mxu0 0.0
    %511 = vmatpush1.msra.mxu0 0.0
    %512 = vmatprep.subr.mxu0 0.0
    %513 = vmatpush1.msra.mxu0 0.0
    %514 = vmatprep.subr.mxu0 0.0
    %515 = vmatpush1.msra.mxu0 0.0
    %516 = vmatprep.subr.mxu0 0.0
    %517 = vmatpush1.msra.mxu0 0.0
    %518 = vmatprep.subr.mxu0 0.0
    %519 = vmatpush1.msra.mxu0 0.0
    %520 = vmatprep.subr.mxu0 0.0
    %521 = vmatpush1.msra.mxu0 0.0
    %522 = vmatprep.subr.mxu0 0.0
    %523 = vmatpush1.msra.mxu0 0.0
    %524 = vmatprep.subr.mxu0 0.0
    %525 = vmatpush1.msra.mxu0 0.0
    %526 = vmatprep.subr.mxu0 0.0
    %527 = vmatpush1.msra.mxu0 0.0
    %528 = vmatprep.subr.mxu0 0.0
    %529 = vmatpush1.msra.mxu0 0.0
    %530 = vmatprep.subr.mxu0 0.0
    %531 = vmatpush1.msra.mxu0 0.0
    %532 = vmatprep.subr.mxu0 0.0
    %533 = vmatpush1.msra.mxu0 0.0
    %534 = vmatprep.subr.mxu0 0.0
    %535 = vmatpush1.msra.mxu0 0.0
    %536 = vmatprep.subr.mxu0 0.0
    %537 = vmatpush1.msra.mxu0 0.0
    %538 = vmatprep.subr.mxu0 0.0
    %539 = vmatpush1.msra.mxu0 0.0
    %540 = vmatprep.subr.mxu0 0.0
    %541 = vmatpush1.msra.mxu0 0.0
    %542 = vmatprep.mubr.f32.mxu0 0.0
    %543 = vmatmul.mubr.f32.gmra.mrb[0].mxu0 %v476
    %v544 = vpop.f32.mrb[0].mxu0
    %v545 = vadd.f32 %v474, %v544
    %v546 = vpop.f32.mrb[0].mxu0
    %547 = vdwg.mxu0
    %vm548 = vcmask 17408
    %v549 = vsel %vm548, %v545, -inf
    %550 = vmax.xlane.f32.xlu0 %v549
    %v551 = vpop.xlane.xlu0 %550
    %v552 = vsub.f32 %v545, %v551
    %v553 = vmul.f32 %v552, 1.442695
    %v554 = vpow.pop %v553
    %v555 = vsel %vm548, %v554, 0.0
    %556 = vadd.xlane.f32.xlu0 %v555
    %v557 = vpop.xlane.xlu0 %556
    %v558 = vrcp.pop %v557
    %v559 = vmul.f32 %v554, %v558
    %v560 = vlaneseq
    %v561 = vshrl.u32 %v560, 7
    %v562 = vadd.s32 %v561, 8
    %v563 = vmul.u32 %v29, 7
    %vm564 = vcmp.ge.s32.totalorder %v561, %v563
    %vm565 = vcmp.ge.s32.totalorder %v562, %v563
    %v566 = vadd.s32 %v29, 1
    %v567 = vmul.u32 %v566, 7
    %vm568 = vcmp.lt.s32.totalorder %v561, %v567
    %vm569 = vcmp.lt.s32.totalorder %v562, %v567
    %vm570 = vmand %vm564, %vm568
    %vm571 = vmand %vm565, %vm569
    %v572 = vsel %vm570, 1, 0
    %v573 = vsel %vm571, 1, 0
    %v574 = vcvt.s32.f32 %v572
    %v575 = vcvt.s32.f32 %v573
    %vm576 = vcmask 15360
    %v578 = vsel %vm576, %v574, 0
    %v581 = vsel %vm576, %v575, 0
    %v584 = vsel %vm74, %v559, 0
    %586 = vmatprep.subr.mxu0 0.0
    %587 = vmatpush1.msra.mxu0 %v584
    %588 = vmatprep.subr.mxu0 0.0
    %589 = vmatpush1.msra.mxu0 0.0
    %590 = vmatprep.subr.mxu0 0.0
    %591 = vmatpush1.msra.mxu0 0.0
    %592 = vmatprep.subr.mxu0 0.0
    %593 = vmatpush1.msra.mxu0 0.0
    %594 = vmatprep.subr.mxu0 0.0
    %595 = vmatpush1.msra.mxu0 0.0
    %596 = vmatprep.subr.mxu0 0.0
    %597 = vmatpush1.msra.mxu0 0.0
    %598 = vmatprep.subr.mxu0 0.0
    %599 = vmatpush1.msra.mxu0 0.0
    %600 = vmatprep.subr.mxu0 0.0
    %601 = vmatpush1.msra.mxu0 0.0
    %602 = vmatprep.subr.mxu0 0.0
    %603 = vmatpush1.msra.mxu0 0.0
    %604 = vmatprep.subr.mxu0 0.0
    %605 = vmatpush1.msra.mxu0 0.0
    %606 = vmatprep.subr.mxu0 0.0
    %607 = vmatpush1.msra.mxu0 0.0
    %608 = vmatprep.subr.mxu0 0.0
    %609 = vmatpush1.msra.mxu0 0.0
    %610 = vmatprep.subr.mxu0 0.0
    %611 = vmatpush1.msra.mxu0 0.0
    %612 = vmatprep.subr.mxu0 0.0
    %613 = vmatpush1.msra.mxu0 0.0
    %614 = vmatprep.subr.mxu0 0.0
    %615 = vmatpush1.msra.mxu0 0.0
    %616 = vmatprep.subr.mxu0 0.0
    %617 = vmatpush1.msra.mxu0 0.0
    %618 = vmatprep.subr.mxu0 0.0
    %619 = vmatpush1.msra.mxu0 0.0
    %620 = vmatprep.subr.mxu0 0.0
    %621 = vmatpush1.msra.mxu0 0.0
    %622 = vmatprep.subr.mxu0 0.0
    %623 = vmatpush1.msra.mxu0 0.0
    %624 = vmatprep.subr.mxu0 0.0
    %625 = vmatpush1.msra.mxu0 0.0
    %626 = vmatprep.subr.mxu0 0.0
    %627 = vmatpush1.msra.mxu0 0.0
    %628 = vmatprep.subr.mxu0 0.0
    %629 = vmatpush1.msra.mxu0 0.0
    %630 = vmatprep.subr.mxu0 0.0
    %631 = vmatpush1.msra.mxu0 0.0
    %632 = vmatprep.subr.mxu0 0.0
    %633 = vmatpush1.msra.mxu0 0.0
    %634 = vmatprep.subr.mxu0 0.0
    %635 = vmatpush1.msra.mxu0 0.0
    %636 = vmatprep.subr.mxu0 0.0
    %637 = vmatpush1.msra.mxu0 0.0
    %638 = vmatprep.subr.mxu0 0.0
    %639 = vmatpush1.msra.mxu0 0.0
    %640 = vmatprep.subr.mxu0 0.0
    %641 = vmatpush1.msra.mxu0 0.0
    %642 = vmatprep.subr.mxu0 0.0
    %643 = vmatpush1.msra.mxu0 0.0
    %644 = vmatprep.subr.mxu0 0.0
    %645 = vmatpush1.msra.mxu0 0.0
    %646 = vmatprep.subr.mxu0 0.0
    %647 = vmatpush1.msra.mxu0 0.0
    %648 = vmatprep.subr.mxu0 0.0
    %649 = vmatpush1.msra.mxu0 0.0
    %650 = vmatprep.mubr.f32.mxu0 0.0
    %651 = vmatmul.mubr.f32.gmra.mrb[0].mxu0 %v578
    %v652 = vpop.f32.mrb[0].mxu0
    %v653 = vadd.f32 0.0, %v652
    %v654 = vpop.f32.mrb[0].mxu0
    %655 = vmatprep.mubr.f32.mxu0 0.0
    %656 = vmatmul.mubr.f32.gmra.mrb[0].mxu0 %v581
    %v657 = vpop.f32.mrb[0].mxu0
    %v658 = vadd.f32 0.0, %v657
    %v659 = vpop.f32.mrb[0].mxu0
    %660 = vdwg.mxu0
    %v661 = vld [vmem:[%s4] sm:$0xf]
    %v662 = vld [vmem:[%s4 + $0x4] sm:$0x7]
    %v663 = vunpack.c.l.bf16 %v661
    %v664 = vunpack.c.l.bf16 %v662
    %s665 = scalar_lea.vmem %s4, 8
    %v666 = vld [vmem:[%s665] sm:$0xf]
    %v667 = vld [vmem:[%s665 + $0x4] sm:$0x7]
    %v668 = vunpack.c.l.bf16 %v666
    %v669 = vunpack.c.l.bf16 %v667
    %s670 = scalar_lea.vmem %s4, 16
    %v671 = vld [vmem:[%s670] sm:$0xf]
    %v672 = vld [vmem:[%s670 + $0x4] sm:$0x7]
    %v673 = vunpack.c.l.bf16 %v671
    %v674 = vunpack.c.l.bf16 %v672
    %v675 = vmax.f32 %v663, %v668
    %v676 = vmax.f32 %v664, %v669
    %v677 = vmax.f32 %v675, %v673
    %v678 = vmax.f32 %v676, %v674
    %v679 = vsub.f32 %v663, %v677
    %v680 = vsub.f32 %v664, %v678
    %v681 = vmul.f32 %v679, 1.442695
    %v682 = vpow.pop %v681
    %v683 = vmul.f32 %v680, 1.442695
    %v684 = vpow.pop %v683
    %686 = vset.pattern.permute.xlu0 0
    %687 = vperm.xlu0 %686, %v653
    %v688 = vpop.permute.xlu0 %687
    %691 = vset.pattern.permute.xlu0 0
    %692 = vperm.xlu0 %691, %v658
    %v693 = vpop.permute.xlu0 %692
    %v695 = vmul.f32 %v688, %v682
    %v696 = vmul.f32 %v693, %v684
    %v697 = vadd.f32 %v695, 0.0
    %v698 = vadd.f32 %v696, 0.0
    %v699 = vsub.f32 %v668, %v677
    %v700 = vsub.f32 %v669, %v678
    %v701 = vmul.f32 %v699, 1.442695
    %v702 = vpow.pop %v701
    %v703 = vmul.f32 %v700, 1.442695
    %v704 = vpow.pop %v703
    %705 = vset.pattern.permute.xlu0 1
    %706 = vperm.xlu0 %705, %v653
    %v707 = vpop.permute.xlu0 %706
    %709 = vset.pattern.permute.xlu0 1
    %710 = vperm.xlu0 %709, %v658
    %v711 = vpop.permute.xlu0 %710
    %v713 = vmul.f32 %v707, %v702
    %v714 = vmul.f32 %v711, %v704
    %v715 = vadd.f32 %v697, %v713
    %v716 = vadd.f32 %v698, %v714
    %v717 = vsub.f32 %v673, %v677
    %v718 = vsub.f32 %v674, %v678
    %v719 = vmul.f32 %v717, 1.442695
    %v720 = vpow.pop %v719
    %v721 = vmul.f32 %v718, 1.442695
    %v722 = vpow.pop %v721
    %723 = vset.pattern.permute.xlu0 2
    %724 = vperm.xlu0 %723, %v653
    %v725 = vpop.permute.xlu0 %724
    %727 = vset.pattern.permute.xlu0 2
    %728 = vperm.xlu0 %727, %v658
    %v729 = vpop.permute.xlu0 %728
    %v731 = vmul.f32 %v725, %v720
    %v732 = vmul.f32 %v729, %v722
    %v733 = vadd.f32 %v715, %v731
    %v734 = vadd.f32 %v716, %v732
    %v735 = vlog2.pop %v733
    %v736 = vmul.f32 %v735, 0.6931472
    %v737 = vlog2.pop %v734
    %v738 = vmul.f32 %v737, 0.6931472
    %v739 = vadd.f32 %v677, %v736
    %v740 = vadd.f32 %v678, %v738
    %741 = vst [vmem:[#allocation3] sm:$0xff] %v739
    %742 = vst [vmem:[#allocation3 + $0x8] sm:$0x3f] %v740
    %v743 = vld [vmem:[%s1] sm:$0xff]
    %v744 = vld [vmem:[%s1 + $0x8] sm:$0x3f]
    %745 = vset.pattern.permute.xlu0 0
    %746 = vperm.xlu0 %745, %v743
    %v747 = vpop.permute.xlu0 %746
    %748 = vset.pattern.permute.xlu0 0
    %749 = vperm.xlu0 %748, %v744
    %v750 = vpop.permute.xlu0 %749
    %vm751 = vcmp.eq.s32.totalorder %v29, %v747
    %vm752 = vcmp.eq.s32.totalorder %v29, %v750
    %v753 = vsel %vm751, 1, 0
    %v754 = vsel %vm752, 1, 0
    %v755 = vcvt.s32.f32 %v753
    %v756 = vcvt.s32.f32 %v754
    %vm757 = vcmp.ne.s32.totalorder %v743, 1
    %vm758 = vcmp.ne.s32.totalorder %v744, 1
    %v759 = vsel %vm757, 1, 0
    %v760 = vsel %vm758, 1, 0
    %v761 = vcvt.s32.f32 %v759
    %v762 = vcvt.s32.f32 %v760
    %v763 = vmul.f32 %v739, %v755
    %v764 = vmul.f32 %v740, %v756
    %765 = vadd.xlane.f32.xlu0 %v763
    %v766 = vpop.xlane.xlu0 %765
    %vm767 = vcmask 1045504
    %v768 = vsel %vm767, %v764, 0.0
    %769 = vadd.xlane.f32.xlu0 %v768
    %v770 = vpop.xlane.xlu0 %769
    %v771 = vmul.f32 %v766, %v761
    %v772 = vmul.f32 %v770, %v762
    %vm773 = vcmask 7168
    %v774 = vsel %vm773, %v771, 0.0
    %vm775 = vcmask 5120
    %v776 = vsel %vm775, %v772, 0.0
    %v777 = vadd.f32 %v774, %v776
    %v778 = vrot.slane %v777, 4
    %v779 = vadd.f32 %v777, %v778
    %v780 = vrot.slane %v779, 2
    %v781 = vadd.f32 %v779, %v780
    %v782 = vrot.slane %v781, 1
    %v783 = vadd.f32 %v781, %v782
    %v784 = vsel %vm773, %v761, 0.0
    %v785 = vsel %vm775, %v762, 0.0
    %v786 = vadd.f32 %v784, %v785
    %v787 = vrot.slane %v786, 4
    %v788 = vadd.f32 %v786, %v787
    %v789 = vrot.slane %v788, 2
    %v790 = vadd.f32 %v788, %v789
    %v791 = vrot.slane %v790, 1
    %v792 = vadd.f32 %v790, %v791
    %v793 = vrcp.pop %v792
    %v794 = vmul.f32 %v783, %v793
    %v795 = vsub.f32 0.0, %v794
    %vm796 = vcmask 0
    %797 = vst.msk [vmem:[#allocation5] sm:$0x1] %vm796, %v795
    // Predicated region
    $region22: #{tpu_custom_call.1} parent=1 // pred_check
      _
    $region23: #{tpu_custom_call.1} parent=1 // pred_check_branch
      %799 = sbr.rel (0) target = $region25
    $region24: #{tpu_custom_call.1} parent=1 // pred_region
      %s801 = ssub.s32 256, 256
      %802 = vsyncadd [#allocation4], %s801
      %s803 = sshll.u32 [#allocation3], 4
      %s804 = int_to_ptr.vmem [resolvable:$true] %s803
      %809 = dma.vmem_to_hbm [thread:$0]  %s804, 256, %s5, [#allocation4], 128, 128, 8
    $region25: #{tpu_custom_call.1} parent=1 // pred_fallthru
      _
    // Predicated region
    $region26: #{tpu_custom_call.1} parent=1 // pred_check
      _
    $region27: #{tpu_custom_call.1} parent=1 // pred_check_branch
      %811 = sbr.rel (0) target = $region29
    $region28: #{tpu_custom_call.1} parent=1 // pred_region
      %s813 = ssub.s32 16, 16
      %814 = vsyncadd [#allocation6], %s813
      %s816 = sshll.u32 [#allocation5], 4
      %s817 = int_to_ptr.vmem [resolvable:$true] %s816
      %819 = dma.vmem_to_hbm [thread:$0]  %s817, 16, %s6, [#allocation6]
    $region29: #{tpu_custom_call.1} parent=1 // pred_fallthru
      _
    // Predicated region
    $region30: #{tpu_custom_call.1} parent=1 // pred_check
      _
    $region31: #{tpu_custom_call.1} parent=1 // pred_check_branch
      %821 = sbr.rel (0) target = $region33
    $region32: #{tpu_custom_call.1} parent=1 // pred_region
      %822 = dma.done [#allocation4], 256
    $region33: #{tpu_custom_call.1} parent=1 // pred_fallthru
      _
    // Predicated region
    $region34: #{tpu_custom_call.1} parent=1 // pred_check
      _
    $region35: #{tpu_custom_call.1} parent=1 // pred_check_branch
      %824 = sbr.rel (0) target = $region37
    $region36: #{tpu_custom_call.1} parent=1 // pred_region
      %825 = dma.done [#allocation6], 16
    $region37: #{tpu_custom_call.1} parent=1 // pred_fallthru
      _
    %826 = vsyncpa [#allocation4], 1
    %827 = vsyncpa [#allocation6], 1

</llo_original>
